<compile_context>
chip_gen: v6e
topology: v6e:2x2x1
jax: 0.10.0
libtpu: 0.0.40
codegen_flags: <defaults>
</compile_context>

<pallas_src>
import numpy as np
import jax
import jax.numpy as jnp
from jax import lax
from jax.experimental import pallas as pl
from jax.experimental.pallas import tpu as pltpu

THRESH_LOW = 0.3
THRESH_HIGH = 0.6
IOU_THRESH = 0.05
# AnchorGenerator(sizes=[5], aspect_ratios=[[1.0]]):
#   base anchor = round([-2.5, -2.5, 2.5, 2.5]) = [-2, -2, 2, 2]  (4x4 box)


# ------------------------- constant filter matrices --------------------------
def _filt_matrix(n):
    """Dense (n, n) matrix form of roi_align(output_size=1, sampling_ratio=-1,
    aligned=False) for a 4-wide box centered on each index, along one axis.

    Equivalent to a 5-tap [0.5, 1, 1, 1, 0.5]/4 filter where the depth-1 pad is
    replicate and the depth-2 pad is *negated* replicate (encodes the
    torchvision rule that samples outside [-1, n] contribute 0 while samples in
    [-1, 0) are clamped to index 0).  Assumes n >= 4 (tiny maps would diverge
    from torchvision)."""
    taps = (0.5, 1.0, 1.0, 1.0, 0.5)
    F = np.zeros((n, n), np.float32)
    for i in range(n):
        for t, w in enumerate(taps):
            j = i + t - 2                  # source index in the unpadded row
            if j < -1:                     # p[0]   = -a[0]
                F[i, 0] -= w
            elif j == -1:                  # p[1]   =  a[0]
                F[i, 0] += w
            elif j >= n + 1:               # p[n+3] = -a[n-1]
                F[i, n - 1] -= w
            elif j == n:                   # p[n+2] =  a[n-1]
                F[i, n - 1] += w
            else:
                F[i, j] += w
    return F * 0.25


# ------------------------- Pallas kernel -------------------------------------
def _make_kernel(C, HW):
    def kernel(x1_ref, x2_ref, x3_ref, filt_ref, out_ref):
        # Flat (B, C*HW) blocks; every slice below is lane-aligned (HW is a
        # multiple of 128 for the 16x16 maps this module targets), so the
        # channel reduction is plain, tile-aligned VPU adds.
        d = (jnp.abs(x1_ref[...] - x2_ref[...])
             + jnp.abs(x2_ref[...] - x3_ref[...])).astype(jnp.float32)
        r = d[:, 0:HW]
        for c in range(1, C):              # static unroll: channel reduction
            r = r + d[:, c * HW:(c + 1) * HW]
        r = 0.5 * r                        # (B, HW)
        # Per-sample min/max normalization: divide only the (B, 1) denominator,
        # then broadcast-multiply (keeps the full-width VPU op a cheap mul).
        rmin = jnp.min(r, axis=-1, keepdims=True)
        rmax = jnp.max(r, axis=-1, keepdims=True)
        inv = pl.reciprocal(rmax - rmin + 1e-6, approx=False)
        r = (r - rmin) * inv
        out_ref[:, 0:HW] = r
        # roi_align(output_size=1) over all stride-1 4x4 anchors == separable
        # 5-tap filter; applied as one constant (HW, HW) matmul on the MXU
        # (bf16 operands, f32 accumulate).
        out_ref[:, HW:2 * HW] = jnp.dot(
            r.astype(filt_ref.dtype), filt_ref[...],
            preferred_element_type=jnp.float32)
    return kernel


def _pick_batch_block(n):
    """Samples per grid step: large enough to amortize per-step overhead and
    fill the MXU LHS (up to 256 rows, only a few MiB of VMEM double-buffered),
    but capped near ceil(n/2) so the grid keeps >= 2 steps and the 'parallel'
    axis can shard across both TensorCores on v7x."""
    if n <= 8:
        return n
    b = min(256, -(-n // 2))               # <= ceil(n/2)  => grid >= 2
    return min(n, max(8, -(-b // 8) * 8))  # round up to a sublane multiple of 8


def residual_and_roi(x1, x2, x3):
    # NOTE: at realistic N this kernel is HBM-read-bound on x1/x2/x3; feeding
    # bf16 features (cast by the producer, not here) halves that traffic — the
    # kernel upcasts to f32 internally, so results only change by bf16 rounding.
    N, C, H, W = x1.shape
    HW = H * W
    # TODO(synk): the Kron-folded (HW, HW) filter grows quadratically; for maps
    # much beyond 32x32 switch to the separable two-matmul form F_h @ R @ F_w^T.
    x1f = x1.reshape(N, C * HW)
    x2f = x2.reshape(N, C * HW)
    x3f = x3.reshape(N, C * HW)
    # Combined 2-D filter in flattened row-major layout: rvec(F_h R F_w^T)
    #   = rvec(R) @ (F_h ⊗ F_w)^T.  Compile-time constant; exact in bf16
    #   (all entries are small multiples of 1/64).
    filt = jnp.asarray(np.kron(_filt_matrix(H), _filt_matrix(W)).T,
                       dtype=jnp.bfloat16)                       # (HW, HW)

    B = _pick_batch_block(N)
    grid = (pl.cdiv(N, B),)
    grid_spec = pltpu.PrefetchScalarGridSpec(
        num_scalar_prefetch=0,
        grid=grid,
        in_specs=[pl.BlockSpec((B, C * HW), lambda n: (n, 0)),
                  pl.BlockSpec((B, C * HW), lambda n: (n, 0)),
                  pl.BlockSpec((B, C * HW), lambda n: (n, 0)),
                  # Constant index_map -> the filter block is grid-resident.
                  pl.BlockSpec((HW, HW), lambda n: (0, 0))],
        # Single lane-dense output slab: [:, :HW] = residual map, [:, HW:] = logits.
        out_specs=pl.BlockSpec((B, 2 * HW), lambda n: (n, 0)),
    )
    out = pl.pallas_call(
        _make_kernel(C, HW),
        out_shape=jax.ShapeDtypeStruct((N, 2 * HW), jnp.float32),
        grid_spec=grid_spec,
        compiler_params=pltpu.CompilerParams(
            dimension_semantics=("parallel",)),
    )(x1f, x2f, x3f, filt)
    # Split the packed slab and reshape back to the NCHW view the module exposes.
    rmap = out[:, :HW].reshape(N, 1, H, W)
    logit = out[:, HW:].reshape(N, 1, H, W)
    return rmap, logit


# ------------------------- plain-JAX reference (same math, for sanity) -------
def _filt0(a):
    """Reference-only separable form of the same filter (axis 0)."""
    n = a.shape[0]
    top = a[0:1]
    bot = a[n - 1:n]
    p = jnp.concatenate([-top, top, a, bot, -bot], axis=0)  # (n+4, ...)
    return (0.5 * p[0:n] + p[1:n + 1] + p[2:n + 2] + p[3:n + 3]
            + 0.5 * p[4:n + 4]) * 0.25


def _reference(x1, x2, x3):
    r = 0.5 * (jnp.sum(jnp.abs(x1 - x2), axis=1)
               + jnp.sum(jnp.abs(x2 - x3), axis=1))
    rmin = r.reshape(r.shape[0], -1).min(-1)[:, None, None]
    rmax = r.reshape(r.shape[0], -1).max(-1)[:, None, None]
    r = (r - rmin) / (rmax - rmin + 1e-6)
    g = jax.vmap(lambda a: _filt0(_filt0(a).T).T)(r)
    return r[:, None], g[:, None]


# ------------------------- box glue (plain JAX) -------------------------------
def _box_iou(b):
    area = (b[:, 2] - b[:, 0]) * (b[:, 3] - b[:, 1])
    lt = jnp.maximum(b[:, None, :2], b[None, :, :2])
    rb = jnp.minimum(b[:, None, 2:], b[None, :, 2:])
    wh = jnp.clip(rb - lt, 0.0)
    inter = wh[..., 0] * wh[..., 1]
    return inter / (area[:, None] + area[None, :] - inter)


def _nms_mask(boxes, scores, valid, iou_thresh):
    """Greedy NMS (torchvision.ops.nms kept set) as a fixed-size boolean mask."""
    k = boxes.shape[0]
    s = jnp.where(valid, scores, -jnp.inf)
    order = jnp.argsort(-s)
    boxes_s = boxes[order]
    valid_s = valid[order]
    iou = _box_iou(boxes_s)
    idx = jnp.arange(k)

    def body(i, keep):
        suppress = (iou[i] > iou_thresh) & (idx > i)
        return jnp.where(keep[i], keep & ~suppress, keep)

    keep_s = lax.fori_loop(0, k, body, valid_s)
    return jnp.zeros((k,), bool).at[order].set(keep_s)


def forward(x1, x2, x3):
    N, C, H, W = x1.shape
    # NOTE: like the PyTorch module (which indexes anchors[0] and broadcasts the
    # residual map into a single 4-D image), the box/NMS path assumes batch == 1
    # and operates on sample 0.
    rmap, logit_map = residual_and_roi(x1, x2, x3)

    # AnchorGenerator equivalent: stride-1 grid, base anchor [-2,-2,2,2].
    ys, xs = jnp.meshgrid(jnp.arange(H, dtype=jnp.float32),
                          jnp.arange(W, dtype=jnp.float32), indexing="ij")
    xs = xs.reshape(-1)
    ys = ys.reshape(-1)
    anchors = jnp.stack([xs - 2.0, ys - 2.0, xs + 2.0, ys + 2.0], axis=1)

    logits = logit_map[0, 0].reshape(-1)           # == roi_align(...).flatten(0)
    logits = logits / (jnp.max(logits) + 1e-6)

    flags_low = (logits > THRESH_LOW) & (logits < THRESH_HIGH)
    flags_high = logits > THRESH_HIGH
    keep_low = _nms_mask(anchors, logits, flags_low, 0.1)
    keep_high = _nms_mask(anchors, logits, flags_high, IOU_THRESH)
    keep = _nms_mask(anchors, logits, keep_low | keep_high, IOU_THRESH)
    # TODO(synk): torch boolean indexing / nms return data-dependent shapes; the
    # final gather into a (K, 5) tensor is performed host-side on these masks.
    return anchors, logits, keep, rmap, logit_map


if __name__ == "__main__":
    key = jax.random.PRNGKey(0)
    k1, k2, k3 = jax.random.split(key, 3)
    N, C, H, W = 2, 4, 16, 16
    x1 = jax.random.normal(k1, (N, C, H, W), jnp.float32)
    x2 = jax.random.normal(k2, (N, C, H, W), jnp.float32)
    x3 = jax.random.normal(k3, (N, C, H, W), jnp.float32)

    anchors, scores, keep, rmap, logit_map = jax.jit(forward)(x1, x2, x3)
    jax.block_until_ready((anchors, scores, keep, rmap, logit_map))

    # Sanity-check Pallas lowering against a pure-JAX reference of the same math.
    r_ref, g_ref = _reference(x1, x2, x3)
    np.testing.assert_allclose(np.asarray(rmap), np.asarray(r_ref),
                               rtol=1e-5, atol=1e-5)
    # Logit path uses bf16 MXU operands (f32 accumulate) -> ~1e-3 rel error.
    np.testing.assert_allclose(np.asarray(logit_map), np.asarray(g_ref),
                               rtol=1e-2, atol=1e-2)

    # Final dynamic-shape selection (host side), sorted by descending score as
    # torchvision.nms index order would produce: bboxes = [x1, y1, x2, y2, score].
    keep_np = np.asarray(keep)
    boxes_np = np.asarray(anchors)[keep_np]
    scores_np = np.asarray(scores)[keep_np]
    order = np.argsort(-scores_np, kind="stable")
    bboxes = np.concatenate([boxes_np[order], scores_np[order][:, None]],
                            axis=-1)
    assert bboxes.ndim == 2 and bboxes.shape[-1] == 5

    print("KERNEL_OK")
</pallas_src>

<mosaic_0001>
module attributes {stable_mosaic.version = 11 : i64} {
  func.func @kernel(%arg0: i32, %arg1: memref<2x1024xf32, #tpu.memory_space<vmem>>, %arg2: memref<2x1024xf32, #tpu.memory_space<vmem>>, %arg3: memref<2x1024xf32, #tpu.memory_space<vmem>>, %arg4: memref<256x256xbf16, #tpu.memory_space<vmem>>, %arg5: memref<2x512xf32, #tpu.memory_space<vmem>>) attributes {dimension_semantics = [#tpu.dimension_semantics<parallel>], iteration_bounds = array<i64: 1>, scalar_prefetch = 0 : i64, scratch_operands = 0 : i64, tpu.core_type = #tpu.core_type<tc>, window_params = [{transform_indices = @transform_0, window_bounds = array<i64: 2, 1024>}, {transform_indices = @transform_1, window_bounds = array<i64: 2, 1024>}, {transform_indices = @transform_2, window_bounds = array<i64: 2, 1024>}, {pipeline_mode = #tpu.pipeline_mode<synchronous>, transform_indices = @transform_3, window_bounds = array<i64: 256, 256>}, {transform_indices = @transform_4, window_bounds = array<i64: 2, 512>}]} {
    %c0 = arith.constant 0 : index
    %c0_0 = arith.constant 0 : index
    %0 = vector.load %arg1[%c0, %c0_0] : memref<2x1024xf32, #tpu.memory_space<vmem>>, vector<2x1024xf32>
    %c0_1 = arith.constant 0 : index
    %c0_2 = arith.constant 0 : index
    %1 = vector.load %arg2[%c0_1, %c0_2] : memref<2x1024xf32, #tpu.memory_space<vmem>>, vector<2x1024xf32>
    %2 = arith.subf %0, %1 : vector<2x1024xf32>
    %3 = math.absf %2 : vector<2x1024xf32>
    %c0_3 = arith.constant 0 : index
    %c0_4 = arith.constant 0 : index
    %4 = vector.load %arg2[%c0_3, %c0_4] : memref<2x1024xf32, #tpu.memory_space<vmem>>, vector<2x1024xf32>
    %c0_5 = arith.constant 0 : index
    %c0_6 = arith.constant 0 : index
    %5 = vector.load %arg3[%c0_5, %c0_6] : memref<2x1024xf32, #tpu.memory_space<vmem>>, vector<2x1024xf32>
    %6 = arith.subf %4, %5 : vector<2x1024xf32>
    %7 = math.absf %6 : vector<2x1024xf32>
    %8 = arith.addf %3, %7 : vector<2x1024xf32>
    %9 = vector.extract_strided_slice %8 {offsets = [0, 0], sizes = [2, 256], strides = [1, 1]} : vector<2x1024xf32> to vector<2x256xf32>
    %10 = vector.extract_strided_slice %8 {offsets = [0, 256], sizes = [2, 256], strides = [1, 1]} : vector<2x1024xf32> to vector<2x256xf32>
    %11 = arith.addf %9, %10 : vector<2x256xf32>
    %12 = vector.extract_strided_slice %8 {offsets = [0, 512], sizes = [2, 256], strides = [1, 1]} : vector<2x1024xf32> to vector<2x256xf32>
    %13 = arith.addf %11, %12 : vector<2x256xf32>
    %14 = vector.extract_strided_slice %8 {offsets = [0, 768], sizes = [2, 256], strides = [1, 1]} : vector<2x1024xf32> to vector<2x256xf32>
    %15 = arith.addf %13, %14 : vector<2x256xf32>
    %cst = arith.constant 5.000000e-01 : f32
    %16 = vector.broadcast %cst : f32 to vector<2x256xf32>
    %17 = arith.mulf %16, %15 : vector<2x256xf32>
    %cst_7 = arith.constant dense<0x7F800000> : vector<2xf32>
    %18 = vector.multi_reduction <minimumf>, %17, %cst_7 [1] : vector<2x256xf32> to vector<2xf32>
    %19 = vector.shape_cast %18 : vector<2xf32> to vector<2x1xf32>
    %cst_8 = arith.constant dense<0xFF800000> : vector<2xf32>
    %20 = vector.multi_reduction <maximumf>, %17, %cst_8 [1] : vector<2x256xf32> to vector<2xf32>
    %21 = vector.shape_cast %20 : vector<2xf32> to vector<2x1xf32>
    %22 = arith.subf %21, %19 : vector<2x1xf32>
    %cst_9 = arith.constant 9.99999997E-7 : f32
    %23 = vector.broadcast %cst_9 : f32 to vector<2x1xf32>
    %24 = arith.addf %22, %23 : vector<2x1xf32>
    %25 = tpu.reciprocal %24 : vector<2x1xf32> -> vector<2x1xf32>
    %26 = vector.broadcast %19 : vector<2x1xf32> to vector<2x256xf32>
    %27 = arith.subf %17, %26 : vector<2x256xf32>
    %28 = vector.broadcast %25 : vector<2x1xf32> to vector<2x256xf32>
    %29 = arith.mulf %27, %28 : vector<2x256xf32>
    %c0_10 = arith.constant 0 : index
    %c0_11 = arith.constant 0 : index
    %30 = vector.load %arg5[%c0_10, %c0_11] : memref<2x512xf32, #tpu.memory_space<vmem>>, vector<2x256xf32>
    tpu.vector_store %arg5[%c0_10, %c0_11], %29 {strides = array<i32>} : memref<2x512xf32, #tpu.memory_space<vmem>>, vector<2x256xf32>,
    %31 = arith.truncf %29 : vector<2x256xf32> to vector<2x256xbf16>
    %c0_12 = arith.constant 0 : index
    %c0_13 = arith.constant 0 : index
    %32 = vector.load %arg4[%c0_12, %c0_13] : memref<256x256xbf16, #tpu.memory_space<vmem>>, vector<256x256xbf16>
    %cst_14 = arith.constant dense<0.000000e+00> : vector<2x256xf32>
    %33 = tpu.matmul %31, %32, %cst_14 {dimension_numbers = #tpu.dot_dimension_numbers<[1], [0], [0], [1], [0, 0, 1, 1], [], []>} : vector<2x256xbf16>, vector<256x256xbf16>, vector<2x256xf32> -> vector<2x256xf32>
    %c0_15 = arith.constant 0 : index
    %c256 = arith.constant 256 : index
    %34 = vector.load %arg5[%c0_15, %c256] : memref<2x512xf32, #tpu.memory_space<vmem>>, vector<2x256xf32>
    tpu.vector_store %arg5[%c0_15, %c256], %33 {strides = array<i32>} : memref<2x512xf32, #tpu.memory_space<vmem>>, vector<2x256xf32>,
    return
  }
  func.func @transform_0(%arg0: i32) -> (i32, i32) {
    %c0_i32 = arith.constant 0 : i32
    %c0_i32_0 = arith.constant 0 : i32
    return %arg0, %c0_i32 : i32, i32
  }
  func.func @transform_1(%arg0: i32) -> (i32, i32) {
    %c0_i32 = arith.constant 0 : i32
    %c0_i32_0 = arith.constant 0 : i32
    return %arg0, %c0_i32 : i32, i32
  }
  func.func @transform_2(%arg0: i32) -> (i32, i32) {
    %c0_i32 = arith.constant 0 : i32
    %c0_i32_0 = arith.constant 0 : i32
    return %arg0, %c0_i32 : i32, i32
  }
  func.func @transform_3(%arg0: i32) -> (i32, i32) {
    %c0_i32 = arith.constant 0 : i32
    %c0_i32_0 = arith.constant 0 : i32
    %c0_i32_1 = arith.constant 0 : i32
    return %c0_i32, %c0_i32_0 : i32, i32
  }
  func.func @transform_4(%arg0: i32) -> (i32, i32) {
    %c0_i32 = arith.constant 0 : i32
    %c0_i32_0 = arith.constant 0 : i32
    return %arg0, %c0_i32 : i32, i32
  }
}

</mosaic_0001>

<llo_original>
// kernel: forward.1
$region0: #{forward.1}
  #allocation0 [shape = 'u32[]', space=smem, size = 0x4, offset = 0x4, fixed_abs, tag = 'smem constant byte address 0x4 - core index']
  #allocation1 [shape = 'u32[144,128]{1,0:T(1,128)}', space=vmem, size = 0x12000, scoped, tag = 'internal scratch']
  %s0 = inlined_call_operand.vmem [shape: f32[2,1024], index: 0, kind: input, shape index: {}]
  %s1 = inlined_call_operand.vmem [shape: f32[2,1024], index: 1, kind: input, shape index: {}]
  %s2 = inlined_call_operand.vmem [shape: f32[2,1024], index: 2, kind: input, shape index: {}]
  %s3 = inlined_call_operand.vmem [shape: bf16[256,256], index: 3, kind: input, shape index: {}]
  %s4 = inlined_call_operand.vmem [shape: f32[2,512], index: 4, kind: output, shape index: {}]
  %s5 = sld [smem:[#allocation0]]
  $region26: #{forward.1} parent=0
    _
  %s7 = ssub.s32 1, %s5
  %s8 = scalar_select 0, %s7, %s5
  // Predicated region
  $region2: #{forward.1} parent=0 // pred_check
    _
  $region3: #{forward.1} parent=0 // pred_check_branch
    %10 = sbr.rel (0) target = $region5
  $region4: #{forward.1} parent=0 // pred_region
    _
  $region5: #{forward.1} parent=0 // pred_fallthru
    _
  // Predicated region
  $region6: #{forward.1} parent=0 // pred_check
    _
  $region7: #{forward.1} parent=0 // pred_check_branch
    %12 = sbr.rel (0) target = $region9
  $region8: #{forward.1} parent=0 // pred_region
    _
  $region9: #{forward.1} parent=0 // pred_fallthru
    _
  // Predicated region
  $region10: #{forward.1} parent=0 // pred_check
    _
  $region11: #{forward.1} parent=0 // pred_check_branch
    %14 = sbr.rel (0) target = $region13
  $region12: #{forward.1} parent=0 // pred_region
    _
  $region13: #{forward.1} parent=0 // pred_fallthru
    _
  // Predicated region
  $region14: #{forward.1} parent=0 // pred_check
    _
  $region15: #{forward.1} parent=0 // pred_check_branch
    %16 = sbr.rel (0) target = $region17
  $region16: #{forward.1} parent=0 // pred_region
    _
  $region17: #{forward.1} parent=0 // pred_fallthru
    _
  %v17 = vld [vmem:[%s0] sm:$0xff]
  %v18 = vld [vmem:[%s0 + $0x8] sm:$0xff]
  %v19 = vld [vmem:[%s1] sm:$0xff]
  %v20 = vld [vmem:[%s1 + $0x8] sm:$0xff]
  %v21 = vsub.f32 %v17, %v19
  %v22 = vsub.f32 %v18, %v20
  %v23 = vand.u32 2147483647, %v21
  %v24 = vand.u32 2147483647, %v22
  %v25 = vld [vmem:[%s2] sm:$0xff]
  %v26 = vld [vmem:[%s2 + $0x8] sm:$0xff]
  %v27 = vsub.f32 %v19, %v25
  %v28 = vsub.f32 %v20, %v26
  %v29 = vand.u32 2147483647, %v27
  %v30 = vand.u32 2147483647, %v28
  %v31 = vadd.f32 %v23, %v29
  %v32 = vadd.f32 %v24, %v30
  %v34 = vrot.slane %v31, 4
  %v36 = vadd.f32 %v31, %v34
  %v37 = vadd.f32 %v36, %v32
  %v39 = vrot.slane %v32, 4
  %v41 = vadd.f32 %v37, %v39
  %v42 = vmul.f32 %v41, 0.5
  %v45 = vunpack.c.l.s4 1983009808
  %v46 = vunpack.c.0.s8 %v45
  %v47 = vlaneseq
  %v48 = vshrl.u32 %v47, 7
  %v49 = vsub.s32 %v46, %v48
  %v50 = vrot.slane %v42, %v49
  %v51 = vcombine.high %v50, %v50
  %vm54 = vcmask 1041408
  %v55 = vsel %vm54, %v50, inf
  %v56 = vsel %vm54, %v51, inf
  %v57 = vmin.f32 %v55, %v56
  %58 = vmin.xlane.f32.xlu0 %v57
  %v59 = vpop.xlane.xlu0 %58
  %v60 = vsel %vm54, %v50, -inf
  %v61 = vsel %vm54, %v51, -inf
  %v62 = vmax.f32 %v60, %v61
  %63 = vmax.xlane.f32.xlu0 %v62
  %v64 = vpop.xlane.xlu0 %63
  %v65 = vsub.f32 %v64, %v59
  %v66 = vadd.f32 %v65, 1e-06
  %v67 = vrcp.pop %v66
  %v70 = vunpack.c.l.s4 269488144
  %v71 = vunpack.c.0.s8 %v70
  %v72 = vlaneseq
  %v73 = vshrl.u32 %v72, 7
  %v74 = vsub.s32 %v71, %v73
  %v75 = vrot.slane %v59, %v74
  %v77 = vsub.f32 %v42, %v75
  %v80 = vunpack.c.l.s4 269488144
  %v81 = vunpack.c.0.s8 %v80
  %v82 = vlaneseq
  %v83 = vshrl.u32 %v82, 7
  %v84 = vsub.s32 %v81, %v83
  %v85 = vrot.slane %v67, %v84
  %v87 = vmul.f32 %v77, %v85
  %88 = vst [vmem:[%s4] sm:$0xf] %v87
  %v91 = vunpack.c.l.s4 1983009808
  %v92 = vunpack.c.0.s8 %v91
  %v93 = vlaneseq
  %v94 = vshrl.u32 %v93, 7
  %v95 = vsub.s32 %v92, %v94
  %v96 = vrot.slane %v87, %v95
  %v97 = vcombine.high %v96, %v96
  %v100 = vpack.c.bf16 %v96, %v96
  %v101 = vpack.c.bf16 %v97, %v97
  %v102 = vld [vmem:[%s3] sm:$0xff]
  %v103 = vld [vmem:[%s3 + $0x8] sm:$0xff]
  %v104 = vld [vmem:[%s3 + $0x10] sm:$0xff]
  %v105 = vld [vmem:[%s3 + $0x18] sm:$0xff]
  %v106 = vld [vmem:[%s3 + $0x20] sm:$0xff]
  %v107 = vld [vmem:[%s3 + $0x28] sm:$0xff]
  %v108 = vld [vmem:[%s3 + $0x30] sm:$0xff]
  %v109 = vld [vmem:[%s3 + $0x38] sm:$0xff]
  %v110 = vld [vmem:[%s3 + $0x40] sm:$0xff]
  %v111 = vld [vmem:[%s3 + $0x48] sm:$0xff]
  %v112 = vld [vmem:[%s3 + $0x50] sm:$0xff]
  %v113 = vld [vmem:[%s3 + $0x58] sm:$0xff]
  %v114 = vld [vmem:[%s3 + $0x60] sm:$0xff]
  %v115 = vld [vmem:[%s3 + $0x68] sm:$0xff]
  %v116 = vld [vmem:[%s3 + $0x70] sm:$0xff]
  %v117 = vld [vmem:[%s3 + $0x78] sm:$0xff]
  %v118 = vld [vmem:[%s3 + $0x80] sm:$0xff]
  %v119 = vld [vmem:[%s3 + $0x88] sm:$0xff]
  %v120 = vld [vmem:[%s3 + $0x90] sm:$0xff]
  %v121 = vld [vmem:[%s3 + $0x98] sm:$0xff]
  %v122 = vld [vmem:[%s3 + $0xa0] sm:$0xff]
  %v123 = vld [vmem:[%s3 + $0xa8] sm:$0xff]
  %v124 = vld [vmem:[%s3 + $0xb0] sm:$0xff]
  %v125 = vld [vmem:[%s3 + $0xb8] sm:$0xff]
  %v126 = vld [vmem:[%s3 + $0xc0] sm:$0xff]
  %v127 = vld [vmem:[%s3 + $0xc8] sm:$0xff]
  %v128 = vld [vmem:[%s3 + $0xd0] sm:$0xff]
  %v129 = vld [vmem:[%s3 + $0xd8] sm:$0xff]
  %v130 = vld [vmem:[%s3 + $0xe0] sm:$0xff]
  %v131 = vld [vmem:[%s3 + $0xe8] sm:$0xff]
  %v132 = vld [vmem:[%s3 + $0xf0] sm:$0xff]
  %v133 = vld [vmem:[%s3 + $0xf8] sm:$0xff]
  %v166 = vunpack.c.l.b16 %v102
  %v167 = vunpack.c.h.b16 %v102
  %v168 = vunpack.c.l.b16 %v103
  %v169 = vunpack.c.h.b16 %v103
  %v170 = vunpack.c.l.b16 %v104
  %v171 = vunpack.c.h.b16 %v104
  %v172 = vunpack.c.l.b16 %v105
  %v173 = vunpack.c.h.b16 %v105
  %v174 = vunpack.c.l.b16 %v106
  %v175 = vunpack.c.h.b16 %v106
  %v176 = vunpack.c.l.b16 %v107
  %v177 = vunpack.c.h.b16 %v107
  %v178 = vunpack.c.l.b16 %v108
  %v179 = vunpack.c.h.b16 %v108
  %v180 = vunpack.c.l.b16 %v109
  %v181 = vunpack.c.h.b16 %v109
  %v182 = vunpack.c.l.b16 %v110
  %v183 = vunpack.c.h.b16 %v110
  %v184 = vunpack.c.l.b16 %v111
  %v185 = vunpack.c.h.b16 %v111
  %v186 = vunpack.c.l.b16 %v112
  %v187 = vunpack.c.h.b16 %v112
  %v188 = vunpack.c.l.b16 %v113
  %v189 = vunpack.c.h.b16 %v113
  %v190 = vunpack.c.l.b16 %v114
  %v191 = vunpack.c.h.b16 %v114
  %v192 = vunpack.c.l.b16 %v115
  %v193 = vunpack.c.h.b16 %v115
  %v194 = vunpack.c.l.b16 %v116
  %v195 = vunpack.c.h.b16 %v116
  %v196 = vunpack.c.l.b16 %v117
  %v197 = vunpack.c.h.b16 %v117
  %v198 = vunpack.c.l.b16 %v118
  %v199 = vunpack.c.h.b16 %v118
  %v200 = vunpack.c.l.b16 %v119
  %v201 = vunpack.c.h.b16 %v119
  %v202 = vunpack.c.l.b16 %v120
  %v203 = vunpack.c.h.b16 %v120
  %v204 = vunpack.c.l.b16 %v121
  %v205 = vunpack.c.h.b16 %v121
  %v206 = vunpack.c.l.b16 %v122
  %v207 = vunpack.c.h.b16 %v122
  %v208 = vunpack.c.l.b16 %v123
  %v209 = vunpack.c.h.b16 %v123
  %v210 = vunpack.c.l.b16 %v124
  %v211 = vunpack.c.h.b16 %v124
  %v212 = vunpack.c.l.b16 %v125
  %v213 = vunpack.c.h.b16 %v125
  %v214 = vunpack.c.l.b16 %v126
  %v215 = vunpack.c.h.b16 %v126
  %v216 = vunpack.c.l.b16 %v127
  %v217 = vunpack.c.h.b16 %v127
  %v218 = vunpack.c.l.b16 %v128
  %v219 = vunpack.c.h.b16 %v128
  %v220 = vunpack.c.l.b16 %v129
  %v221 = vunpack.c.h.b16 %v129
  %v222 = vunpack.c.l.b16 %v130
  %v223 = vunpack.c.h.b16 %v130
  %v224 = vunpack.c.l.b16 %v131
  %v225 = vunpack.c.h.b16 %v131
  %v226 = vunpack.c.l.b16 %v132
  %v227 = vunpack.c.h.b16 %v132
  %v228 = vunpack.c.l.b16 %v133
  %v229 = vunpack.c.h.b16 %v133
  %v230 = vpack.c.b16 %v168, %v166
  %v231 = vpack.c.b16 %v169, %v167
  %v232 = vpack.c.b16 %v172, %v170
  %v233 = vpack.c.b16 %v173, %v171
  %v234 = vpack.c.b16 %v176, %v174
  %v235 = vpack.c.b16 %v177, %v175
  %v236 = vpack.c.b16 %v180, %v178
  %v237 = vpack.c.b16 %v181, %v179
  %v238 = vpack.c.b16 %v184, %v182
  %v239 = vpack.c.b16 %v185, %v183
  %v240 = vpack.c.b16 %v188, %v186
  %v241 = vpack.c.b16 %v189, %v187
  %v242 = vpack.c.b16 %v192, %v190
  %v243 = vpack.c.b16 %v193, %v191
  %v244 = vpack.c.b16 %v196, %v194
  %v245 = vpack.c.b16 %v197, %v195
  %v246 = vpack.c.b16 %v200, %v198
  %v247 = vpack.c.b16 %v201, %v199
  %v248 = vpack.c.b16 %v204, %v202
  %v249 = vpack.c.b16 %v205, %v203
  %v250 = vpack.c.b16 %v208, %v206
  %v251 = vpack.c.b16 %v209, %v207
  %v252 = vpack.c.b16 %v212, %v210
  %v253 = vpack.c.b16 %v213, %v211
  %v254 = vpack.c.b16 %v216, %v214
  %v255 = vpack.c.b16 %v217, %v215
  %v256 = vpack.c.b16 %v220, %v218
  %v257 = vpack.c.b16 %v221, %v219
  %v258 = vpack.c.b16 %v224, %v222
  %v259 = vpack.c.b16 %v225, %v223
  %v260 = vpack.c.b16 %v228, %v226
  %v261 = vpack.c.b16 %v229, %v227
  %294 = vmatprep.subr.bf16.mxu0 %v245
  %295 = vmatpush1.bf16.msra.mxu0 %v244
  %296 = vmatprep.subr.bf16.mxu0 %v243
  %297 = vmatpush1.bf16.msra.mxu0 %v242
  %298 = vmatprep.subr.bf16.mxu0 %v241
  %299 = vmatpush1.bf16.msra.mxu0 %v240
  %300 = vmatprep.subr.bf16.mxu0 %v239
  %301 = vmatpush1.bf16.msra.mxu0 %v238
  %302 = vmatprep.subr.bf16.mxu0 %v237
  %303 = vmatpush1.bf16.msra.mxu0 %v236
  %304 = vmatprep.subr.bf16.mxu0 %v235
  %305 = vmatpush1.bf16.msra.mxu0 %v234
  %306 = vmatprep.subr.bf16.mxu0 %v233
  %307 = vmatpush1.bf16.msra.mxu0 %v232
  %308 = vmatprep.subr.bf16.mxu0 %v231
  %309 = vmatpush1.bf16.msra.mxu0 %v230
  %310 = vmatprep.subr.bf16.mxu0 %v261
  %311 = vmatpush2.bf16.msra.mxu0 %v260
  %312 = vmatprep.subr.bf16.mxu0 %v259
  %313 = vmatpush2.bf16.msra.mxu0 %v258
  %314 = vmatprep.subr.bf16.mxu0 %v257
  %315 = vmatpush2.bf16.msra.mxu0 %v256
  %316 = vmatprep.subr.bf16.mxu0 %v255
  %317 = vmatpush2.bf16.msra.mxu0 %v254
  %318 = vmatprep.subr.bf16.mxu0 %v253
  %319 = vmatpush2.bf16.msra.mxu0 %v252
  %320 = vmatprep.subr.bf16.mxu0 %v251
  %321 = vmatpush2.bf16.msra.mxu0 %v250
  %322 = vmatprep.subr.bf16.mxu0 %v249
  %323 = vmatpush2.bf16.msra.mxu0 %v248
  %324 = vmatprep.subr.bf16.mxu0 %v247
  %325 = vmatpush2.bf16.msra.mxu0 %v246
  %326 = vmatprep.mubr.bf16.mxu0 %v101
  %327 = vmatmul.mubr.bf16.gmra.mxu0 %v100
  %v328 = vpop.f32.mrf.mxu0
  %v329 = vadd.f32 0.0, %v328
  %v330 = vpop.f32.mrf.mxu0
  %v331 = vadd.f32 0.0, %v330
  %v332 = vpop.f32.mrf.mxu0
  %v333 = vpop.f32.mrf.mxu0
  %334 = vdwg.mxu0
  %v337 = vcombine.low %v329, %v331
  %v339 = vunpack.c.l.s4 1983009808
  %v340 = vunpack.c.0.s8 %v339
  %v341 = vlaneseq
  %v342 = vshrl.u32 %v341, 7
  %v343 = vsub.s32 %v340, %v342
  %v344 = vrot.slane %v337, %v343
  %346 = vst [vmem:[%s4 + $0x4] sm:$0xf] %v344
  // Predicated region
  $region18: #{forward.1} parent=0 // pred_check
    _
  $region19: #{forward.1} parent=0 // pred_check_branch
    %348 = sbr.rel (0) target = $region21
  $region20: #{forward.1} parent=0 // pred_region
    _
  $region21: #{forward.1} parent=0 // pred_fallthru
    _
  // Predicated region
  $region22: #{forward.1} parent=0 // pred_check
    _
  $region23: #{forward.1} parent=0 // pred_check_branch
    %350 = sbr.rel (0) target = $region25
  $region24: #{forward.1} parent=0 // pred_region
    _
  $region25: #{forward.1} parent=0 // pred_fallthru
    _

</llo_original>
